<compile_context>
chip_gen: v7x
topology: tpu7x:2x2x1
jax: 0.10.0
libtpu: 0.0.40
codegen_flags: <defaults>
</compile_context>

<pallas_src>
import jax
import jax.numpy as jnp
from jax.experimental import pallas as pl
from jax.experimental.pallas import tpu as pltpu


def _topo_mse_kernel(pred_ref, tgt_ref, w0_ref, r0_ref, w1_ref, r1_ref,
                     out_ref):
    # (TB, HW) lane-dense rows; cast after load (inputs stay native-dtype in HBM).
    pred = pred_ref[...].astype(jnp.float32)
    tgt = tgt_ref[...].astype(jnp.float32)

    # interpolate() degenerate case: constant pred or constant target slice
    # -> getTopoLoss2d returns 0.0 for that slice (both topo dims).
    p_min = jnp.min(pred, axis=-1, keepdims=True)
    p_max = jnp.max(pred, axis=-1, keepdims=True)
    t_min = jnp.min(tgt, axis=-1, keepdims=True)
    t_max = jnp.max(tgt, axis=-1, keepdims=True)
    valid = jnp.where((p_max == p_min) | (t_max == t_min),
                      jnp.float32(0.0), jnp.float32(1.0))          # (TB, 1)

    # loss_topo = ((inter * topo_cp_weight_map - topo_cp_ref_map) ** 2).sum()
    d0 = pred * w0_ref[...].astype(jnp.float32) - r0_ref[...].astype(jnp.float32)
    d1 = pred * w1_ref[...].astype(jnp.float32) - r1_ref[...].astype(jnp.float32)
    # NOTE: for very large H*W prefer chunked partial sums; fine at these sizes.
    row_loss = valid * jnp.sum(d0 * d0 + d1 * d1, axis=-1, keepdims=True)

    # Lane-dense (TB, 128) broadcast store of the per-row scalar.
    out_ref[...] = jnp.broadcast_to(row_loss, out_ref.shape).astype(out_ref.dtype)


def _choose_block_rows(n_rows, row_bytes):
    """Rows per grid step: ~12 MiB of input per step (x2 double-buffered keeps
    us inside the scoped-VMEM budget on v5e/v6e/v7x); multiple of 32 so the
    block is tile-aligned for f32 / bf16 / int8 inputs alike."""
    budget = 12 * 1024 * 1024
    tb = max(1, budget // max(row_bytes, 1))
    tb = min(tb, 1024)
    if tb >= n_rows:
        return n_rows                      # single full-extent block along rows
    return max(32, (tb // 32) * 32)


def simul_topo_loss_mse_2d(pred, target, w0, r0, w1, r1):
    """pred/target/w*/r*: (B, C, H, W). Returns (B,) per-batch loss (float32)."""
    B, C, H, W = pred.shape
    BC, HW = B * C, H * W

    inputs = (pred, target, w0, r0, w1, r1)
    row_bytes = HW * sum(jnp.dtype(x.dtype).itemsize for x in inputs) + 128 * 4
    tb = _choose_block_rows(BC, row_bytes)
    n_blocks = pl.cdiv(BC, tb)
    rows_pad = n_blocks * tb

    def flat(x):
        y = x.reshape(BC, HW)              # lane-dense rows; NO dtype cast here
        if rows_pad != BC:
            y = jnp.pad(y, ((0, rows_pad - BC), (0, 0)))   # zero rows -> loss 0
        return y

    row_spec = pl.BlockSpec((tb, HW), lambda i: (i, 0))

    per_row = pl.pallas_call(
        _topo_mse_kernel,
        out_shape=jax.ShapeDtypeStruct((rows_pad, 128), jnp.float32),
        grid_spec=pltpu.PrefetchScalarGridSpec(
            num_scalar_prefetch=0,
            grid=(n_blocks,),
            in_specs=[row_spec] * 6,
            out_specs=pl.BlockSpec((tb, 128), lambda i: (i, 0)),
        ),
        compiler_params=pltpu.CompilerParams(
            dimension_semantics=("parallel",),
            vmem_limit_bytes=48 * 1024 * 1024,
        ),
    )(*(flat(x) for x in inputs))

    # per (batch, channel) loss = loss_dim0 + loss_dim1 (summed in-kernel);
    # forward = topo1(pred,target) + topo2(pred,target)
    #         = mean over channels of (loss_dim0 + loss_dim1).
    per_bc = per_row[:BC, 0].reshape(B, C)
    return jnp.mean(per_bc, axis=1)


def _make_synthetic_cp_maps(key, target, density=0.05):
    """Deterministic stand-in for the PH-derived critical-point maps:
    weight = 1 at 'critical points' (int8 — exact 0/1, saves HBM bytes),
    ref = target intensity at those points (f32, kept exact)."""
    mask = jax.random.uniform(key, target.shape) < density
    w = mask.astype(jnp.int8)
    r = jnp.where(mask, target, 0.0).astype(jnp.float32)
    return w, r


if __name__ == "__main__":
    B, C, H, W = 2, 4, 16, 16
    key = jax.random.PRNGKey(0)
    k_pred, k_tgt, k_w0, k_w1 = jax.random.split(key, 4)

    pred = jax.random.normal(k_pred, (B, C, H, W), dtype=jnp.float32)
    target = jax.random.normal(k_tgt, (B, C, H, W), dtype=jnp.float32)

    # Synthetic (deterministic) critical-point maps for topo_dim 0 and 1.
    w0, r0 = _make_synthetic_cp_maps(k_w0, target, density=0.05)
    w1, r1 = _make_synthetic_cp_maps(k_w1, target, density=0.05)

    loss_fn = jax.jit(simul_topo_loss_mse_2d)
    out = jax.block_until_ready(loss_fn(pred, target, w0, r0, w1, r1))

    # Pure-JAX reference of the same hot path for sanity.
    def ref_fn(pred, target, w0, r0, w1, r1):
        p = pred.astype(jnp.float32)
        t = target.astype(jnp.float32)
        valid = jnp.where(
            (p.max(axis=(2, 3)) == p.min(axis=(2, 3)))
            | (t.max(axis=(2, 3)) == t.min(axis=(2, 3))), 0.0, 1.0)
        d0 = p * w0.astype(jnp.float32) - r0.astype(jnp.float32)
        d1 = p * w1.astype(jnp.float32) - r1.astype(jnp.float32)
        per_bc = valid * jnp.sum(d0 * d0 + d1 * d1, axis=(2, 3))
        return jnp.mean(per_bc, axis=1)

    expected = ref_fn(pred, target, w0, r0, w1, r1)
    assert out.shape == (B,)
    assert jnp.allclose(out, expected, rtol=1e-5, atol=1e-6), (out, expected)
    print("KERNEL_OK")
</pallas_src>

<mosaic_0001>
module attributes {stable_mosaic.version = 11 : i64} {
  func.func @_topo_mse_kernel(%arg0: i32, %arg1: memref<8x256xf32, #tpu.memory_space<vmem>>, %arg2: memref<8x256xf32, #tpu.memory_space<vmem>>, %arg3: memref<8x256xi8, #tpu.memory_space<vmem>>, %arg4: memref<8x256xf32, #tpu.memory_space<vmem>>, %arg5: memref<8x256xi8, #tpu.memory_space<vmem>>, %arg6: memref<8x256xf32, #tpu.memory_space<vmem>>, %arg7: memref<8x128xf32, #tpu.memory_space<vmem>>) attributes {dimension_semantics = [#tpu.dimension_semantics<parallel>], iteration_bounds = array<i64: 1>, scalar_prefetch = 0 : i64, scratch_operands = 0 : i64, tpu.core_type = #tpu.core_type<tc>, window_params = [{transform_indices = @transform_0, window_bounds = array<i64: 8, 256>}, {transform_indices = @transform_1, window_bounds = array<i64: 8, 256>}, {transform_indices = @transform_2, window_bounds = array<i64: 8, 256>}, {transform_indices = @transform_3, window_bounds = array<i64: 8, 256>}, {transform_indices = @transform_4, window_bounds = array<i64: 8, 256>}, {transform_indices = @transform_5, window_bounds = array<i64: 8, 256>}, {transform_indices = @transform_6, window_bounds = array<i64: 8, 128>}]} {
    %c0 = arith.constant 0 : index
    %c0_0 = arith.constant 0 : index
    %0 = vector.load %arg1[%c0, %c0_0] : memref<8x256xf32, #tpu.memory_space<vmem>>, vector<8x256xf32>
    %c0_1 = arith.constant 0 : index
    %c0_2 = arith.constant 0 : index
    %1 = vector.load %arg2[%c0_1, %c0_2] : memref<8x256xf32, #tpu.memory_space<vmem>>, vector<8x256xf32>
    %cst = arith.constant dense<0x7F800000> : vector<8xf32>
    %2 = vector.multi_reduction <minimumf>, %0, %cst [1] : vector<8x256xf32> to vector<8xf32>
    %3 = vector.shape_cast %2 : vector<8xf32> to vector<8x1xf32>
    %cst_3 = arith.constant dense<0xFF800000> : vector<8xf32>
    %4 = vector.multi_reduction <maximumf>, %0, %cst_3 [1] : vector<8x256xf32> to vector<8xf32>
    %5 = vector.shape_cast %4 : vector<8xf32> to vector<8x1xf32>
    %cst_4 = arith.constant dense<0x7F800000> : vector<8xf32>
    %6 = vector.multi_reduction <minimumf>, %1, %cst_4 [1] : vector<8x256xf32> to vector<8xf32>
    %7 = vector.shape_cast %6 : vector<8xf32> to vector<8x1xf32>
    %cst_5 = arith.constant dense<0xFF800000> : vector<8xf32>
    %8 = vector.multi_reduction <maximumf>, %1, %cst_5 [1] : vector<8x256xf32> to vector<8xf32>
    %9 = vector.shape_cast %8 : vector<8xf32> to vector<8x1xf32>
    %10 = arith.cmpf oeq, %5, %3 : vector<8x1xf32>
    %11 = arith.cmpf oeq, %9, %7 : vector<8x1xf32>
    %12 = arith.ori %10, %11 : vector<8x1xi1>
    %cst_6 = arith.constant 0.000000e+00 : f32
    %cst_7 = arith.constant 1.000000e+00 : f32
    %13 = vector.broadcast %cst_6 : f32 to vector<8x1xf32>
    %14 = vector.broadcast %cst_7 : f32 to vector<8x1xf32>
    %15 = arith.select %12, %13, %14 : vector<8x1xi1>, vector<8x1xf32>
    %c0_8 = arith.constant 0 : index
    %c0_9 = arith.constant 0 : index
    %16 = vector.load %arg3[%c0_8, %c0_9] : memref<8x256xi8, #tpu.memory_space<vmem>>, vector<8x256xi8>
    %17 = arith.sitofp %16 : vector<8x256xi8> to vector<8x256xf32>
    %18 = arith.mulf %0, %17 : vector<8x256xf32>
    %c0_10 = arith.constant 0 : index
    %c0_11 = arith.constant 0 : index
    %19 = vector.load %arg4[%c0_10, %c0_11] : memref<8x256xf32, #tpu.memory_space<vmem>>, vector<8x256xf32>
    %20 = arith.subf %18, %19 : vector<8x256xf32>
    %c0_12 = arith.constant 0 : index
    %c0_13 = arith.constant 0 : index
    %21 = vector.load %arg5[%c0_12, %c0_13] : memref<8x256xi8, #tpu.memory_space<vmem>>, vector<8x256xi8>
    %22 = arith.sitofp %21 : vector<8x256xi8> to vector<8x256xf32>
    %23 = arith.mulf %0, %22 : vector<8x256xf32>
    %c0_14 = arith.constant 0 : index
    %c0_15 = arith.constant 0 : index
    %24 = vector.load %arg6[%c0_14, %c0_15] : memref<8x256xf32, #tpu.memory_space<vmem>>, vector<8x256xf32>
    %25 = arith.subf %23, %24 : vector<8x256xf32>
    %26 = arith.mulf %20, %20 : vector<8x256xf32>
    %27 = arith.mulf %25, %25 : vector<8x256xf32>
    %28 = arith.addf %26, %27 : vector<8x256xf32>
    %cst_16 = arith.constant dense<0.000000e+00> : vector<8xf32>
    %29 = vector.multi_reduction <add>, %28, %cst_16 [1] : vector<8x256xf32> to vector<8xf32>
    %30 = vector.shape_cast %29 : vector<8xf32> to vector<8x1xf32>
    %31 = arith.mulf %15, %30 : vector<8x1xf32>
    %32 = vector.shape_cast %31 : vector<8x1xf32> to vector<8x1xf32>
    %33 = vector.broadcast %32 : vector<8x1xf32> to vector<8x128xf32>
    %c0_17 = arith.constant 0 : index
    %c0_18 = arith.constant 0 : index
    %34 = vector.load %arg7[%c0_17, %c0_18] : memref<8x128xf32, #tpu.memory_space<vmem>>, vector<8x128xf32>
    tpu.vector_store %arg7[%c0_17, %c0_18], %33 {strides = array<i32>} : memref<8x128xf32, #tpu.memory_space<vmem>>, vector<8x128xf32>,
    return
  }
  func.func @transform_0(%arg0: i32) -> (i32, i32) {
    %c0_i32 = arith.constant 0 : i32
    %c0_i32_0 = arith.constant 0 : i32
    return %arg0, %c0_i32 : i32, i32
  }
  func.func @transform_1(%arg0: i32) -> (i32, i32) {
    %c0_i32 = arith.constant 0 : i32
    %c0_i32_0 = arith.constant 0 : i32
    return %arg0, %c0_i32 : i32, i32
  }
  func.func @transform_2(%arg0: i32) -> (i32, i32) {
    %c0_i32 = arith.constant 0 : i32
    %c0_i32_0 = arith.constant 0 : i32
    return %arg0, %c0_i32 : i32, i32
  }
  func.func @transform_3(%arg0: i32) -> (i32, i32) {
    %c0_i32 = arith.constant 0 : i32
    %c0_i32_0 = arith.constant 0 : i32
    return %arg0, %c0_i32 : i32, i32
  }
  func.func @transform_4(%arg0: i32) -> (i32, i32) {
    %c0_i32 = arith.constant 0 : i32
    %c0_i32_0 = arith.constant 0 : i32
    return %arg0, %c0_i32 : i32, i32
  }
  func.func @transform_5(%arg0: i32) -> (i32, i32) {
    %c0_i32 = arith.constant 0 : i32
    %c0_i32_0 = arith.constant 0 : i32
    return %arg0, %c0_i32 : i32, i32
  }
  func.func @transform_6(%arg0: i32) -> (i32, i32) {
    %c0_i32 = arith.constant 0 : i32
    %c0_i32_0 = arith.constant 0 : i32
    return %arg0, %c0_i32 : i32, i32
  }
}

</mosaic_0001>

<llo_original>
// kernel: squeeze.1
$region0: #{squeeze.1}
  %s0 = inlined_call_operand.vmem [shape: f32[8], index: 0, kind: input, shape index: {}]
  %s1 = inlined_call_operand.vmem [shape: f32[2,4], index: 1, kind: output, shape index: {}]
  $region1: #{squeeze.1} parent=0
    #allocation0 [shape = 'u8[4096]{0}', space=vmem, size = 0x1000, scoped, tag = 'scoped mem for output reshape']
    #allocation1 [shape = 'u8[4096]{0}', space=vmem, size = 0x1000, scoped, tag = 'scoped mem for input reshape']
    %s3 = sshllo.u32 0, 1
    %v4 = vld [vmem:[%s0] sm:%s3]
    %5 = vst [vmem:[#allocation1] sm:%s3] %v4
    %v6 = vld [vmem:[#allocation1] sm:$0x1]
    %vm7 = vcmask 31744
    %8 = vst.msk [vmem:[#allocation0] sm:$0x1] %vm7, %v6
    %v9 = vld [vmem:[#allocation1] sm:$0x1]
    %10 = vrot.lane.b32.xlu0 %v9, 124
    %v11 = vpop.permute.xlu0 %10
    %vm12 = vcmask 31744
    %s13 = scalar_lea.vmem [#allocation0], 1
    %14 = vst.msk [vmem:[%s13] sm:$0x1] %vm12, %v11
    %s16 = sshllo.u32 0, 2
    %v18 = vld [vmem:[#allocation0] sm:%s16]
    %s19 = sshllo.u32 0, 2
    %20 = vst [vmem:[%s1] sm:%s19] %v18

// kernel: simul_topo_loss_mse_2d.1
$region0: #{simul_topo_loss_mse_2d.1}
  #allocation0 [shape = 'u32[]', space=smem, size = 0x4, offset = 0x4, fixed_abs, tag = 'smem constant byte address 0x4 - core index']
  #allocation1 [shape = 'u32[144,128]{1,0:T(1,128)}', space=vmem, size = 0x12000, scoped, tag = 'internal scratch']
  %s0 = inlined_call_operand.vmem [shape: f32[8,256], index: 0, kind: input, shape index: {}]
  %s1 = inlined_call_operand.vmem [shape: f32[8,256], index: 1, kind: input, shape index: {}]
  %s2 = inlined_call_operand.vmem [shape: s8[8,256], index: 2, kind: input, shape index: {}]
  %s3 = inlined_call_operand.vmem [shape: f32[8,256], index: 3, kind: input, shape index: {}]
  %s4 = inlined_call_operand.vmem [shape: s8[8,256], index: 4, kind: input, shape index: {}]
  %s5 = inlined_call_operand.vmem [shape: f32[8,256], index: 5, kind: input, shape index: {}]
  %s6 = inlined_call_operand.vmem [shape: f32[8,128], index: 6, kind: output, shape index: {}]
  %s7 = sld [smem:[#allocation0]]
  $region34: #{simul_topo_loss_mse_2d.1} parent=0
    _
  %s9 = ssub.s32 1, %s7
  %s10 = scalar_select 0, %s9, %s7
  // Predicated region
  $region2: #{simul_topo_loss_mse_2d.1} parent=0 // pred_check
    _
  $region3: #{simul_topo_loss_mse_2d.1} parent=0 // pred_check_branch
    %12 = sbr.rel (0) target = $region5
  $region4: #{simul_topo_loss_mse_2d.1} parent=0 // pred_region
    _
  $region5: #{simul_topo_loss_mse_2d.1} parent=0 // pred_fallthru
    _
  // Predicated region
  $region6: #{simul_topo_loss_mse_2d.1} parent=0 // pred_check
    _
  $region7: #{simul_topo_loss_mse_2d.1} parent=0 // pred_check_branch
    %14 = sbr.rel (0) target = $region9
  $region8: #{simul_topo_loss_mse_2d.1} parent=0 // pred_region
    _
  $region9: #{simul_topo_loss_mse_2d.1} parent=0 // pred_fallthru
    _
  // Predicated region
  $region10: #{simul_topo_loss_mse_2d.1} parent=0 // pred_check
    _
  $region11: #{simul_topo_loss_mse_2d.1} parent=0 // pred_check_branch
    %16 = sbr.rel (0) target = $region13
  $region12: #{simul_topo_loss_mse_2d.1} parent=0 // pred_region
    _
  $region13: #{simul_topo_loss_mse_2d.1} parent=0 // pred_fallthru
    _
  // Predicated region
  $region14: #{simul_topo_loss_mse_2d.1} parent=0 // pred_check
    _
  $region15: #{simul_topo_loss_mse_2d.1} parent=0 // pred_check_branch
    %18 = sbr.rel (0) target = $region17
  $region16: #{simul_topo_loss_mse_2d.1} parent=0 // pred_region
    _
  $region17: #{simul_topo_loss_mse_2d.1} parent=0 // pred_fallthru
    _
  // Predicated region
  $region18: #{simul_topo_loss_mse_2d.1} parent=0 // pred_check
    _
  $region19: #{simul_topo_loss_mse_2d.1} parent=0 // pred_check_branch
    %20 = sbr.rel (0) target = $region21
  $region20: #{simul_topo_loss_mse_2d.1} parent=0 // pred_region
    _
  $region21: #{simul_topo_loss_mse_2d.1} parent=0 // pred_fallthru
    _
  // Predicated region
  $region22: #{simul_topo_loss_mse_2d.1} parent=0 // pred_check
    _
  $region23: #{simul_topo_loss_mse_2d.1} parent=0 // pred_check_branch
    %22 = sbr.rel (0) target = $region25
  $region24: #{simul_topo_loss_mse_2d.1} parent=0 // pred_region
    _
  $region25: #{simul_topo_loss_mse_2d.1} parent=0 // pred_fallthru
    _
  %v23 = vld [vmem:[%s0] sm:$0xff]
  %v24 = vld [vmem:[%s0 + $0x8] sm:$0xff]
  %v25 = vld [vmem:[%s1] sm:$0xff]
  %v26 = vld [vmem:[%s1 + $0x8] sm:$0xff]
  %v27 = vmin.f32 %v23, %v24
  %28 = vmin.xlane.f32.xlu0 %v27
  %v29 = vpop.xlane.xlu0 %28
  %v30 = vmax.f32 %v23, %v24
  %31 = vmax.xlane.f32.xlu0 %v30
  %v32 = vpop.xlane.xlu0 %31
  %v33 = vmin.f32 %v25, %v26
  %34 = vmin.xlane.f32.xlu0 %v33
  %v35 = vpop.xlane.xlu0 %34
  %v36 = vmax.f32 %v25, %v26
  %37 = vmax.xlane.f32.xlu0 %v36
  %v38 = vpop.xlane.xlu0 %37
  %vm39 = vcmp.eq.f32.partialorder %v32, %v29
  %vm40 = vcmp.eq.f32.partialorder %v38, %v35
  %vm41 = vmor %vm39, %vm40
  %v42 = vsel %vm41, 0.0, 1.0
  %v43 = vld [vmem:[%s2] sm:$0xf]
  %v44 = vunpack.c.0.s8 %v43
  %v45 = vunpack.c.1.s8 %v43
  %v46 = vcvt.s32.f32 %v44
  %v47 = vcvt.s32.f32 %v45
  %v48 = vmul.f32 %v23, %v46
  %v49 = vmul.f32 %v24, %v47
  %v50 = vld [vmem:[%s3] sm:$0xff]
  %v51 = vld [vmem:[%s3 + $0x8] sm:$0xff]
  %v52 = vsub.f32 %v48, %v50
  %v53 = vsub.f32 %v49, %v51
  %v54 = vld [vmem:[%s4] sm:$0xf]
  %v55 = vunpack.c.0.s8 %v54
  %v56 = vunpack.c.1.s8 %v54
  %v57 = vcvt.s32.f32 %v55
  %v58 = vcvt.s32.f32 %v56
  %v59 = vmul.f32 %v23, %v57
  %v60 = vmul.f32 %v24, %v58
  %v61 = vld [vmem:[%s5] sm:$0xff]
  %v62 = vld [vmem:[%s5 + $0x8] sm:$0xff]
  %v63 = vsub.f32 %v59, %v61
  %v64 = vsub.f32 %v60, %v62
  %v65 = vmul.f32 %v52, %v52
  %v66 = vmul.f32 %v53, %v53
  %v67 = vmul.f32 %v63, %v63
  %v68 = vmul.f32 %v64, %v64
  %v69 = vadd.f32 %v65, %v67
  %v70 = vadd.f32 %v66, %v68
  %v71 = vadd.f32 %v69, %v70
  %72 = vadd.xlane.f32.xlu0 %v71
  %v73 = vpop.xlane.xlu0 %72
  %v74 = vmul.f32 %v42, %v73
  %75 = vst [vmem:[%s6] sm:$0xff] %v74
  // Predicated region
  $region26: #{simul_topo_loss_mse_2d.1} parent=0 // pred_check
    _
  $region27: #{simul_topo_loss_mse_2d.1} parent=0 // pred_check_branch
    %77 = sbr.rel (0) target = $region29
  $region28: #{simul_topo_loss_mse_2d.1} parent=0 // pred_region
    _
  $region29: #{simul_topo_loss_mse_2d.1} parent=0 // pred_fallthru
    _
  // Predicated region
  $region30: #{simul_topo_loss_mse_2d.1} parent=0 // pred_check
    _
  $region31: #{simul_topo_loss_mse_2d.1} parent=0 // pred_check_branch
    %79 = sbr.rel (0) target = $region33
  $region32: #{simul_topo_loss_mse_2d.1} parent=0 // pred_region
    _
  $region33: #{simul_topo_loss_mse_2d.1} parent=0 // pred_fallthru
    _

</llo_original>
